<compile_context>
chip_gen: v7x
topology: tpu7x:2x2x1
jax: 0.10.0
libtpu: 0.0.40
codegen_flags: <defaults>
</compile_context>

<pallas_src>
import math
import functools

import jax
import jax.numpy as jnp
from jax import lax
from jax.experimental import pallas as pl
from jax.experimental.pallas import tpu as pltpu


def _round_up(x, m):
    return (x + m - 1) // m * m


def _vmem_capacity_bytes():
    """Physical VMEM per TensorCore (generation-aware), with a safe fallback."""
    try:
        cap = getattr(pltpu.get_tpu_info(), "vmem_capacity_bytes", None)
        if cap:
            return int(cap)
    except Exception:
        pass
    return 64 << 20        # conservative: v7x per-TensorCore VMEM


def _sscorer_kernel(e1_ref, e2_ref, labels_ref,
                    wd_ref, bd_ref, g_ref, b_ref, wdec_ref, bdec_ref,
                    logits_ref, loss_ref,
                    *, eps, d_model, num_classes, batch, tile_b, mxu_dtype):
    d_pad = e1_ref.shape[-1]
    c_pad = logits_ref.shape[-1]

    # distance = |embedding1 - embedding2|  (native dtype; cast only for the MXU)
    dist = jnp.abs(e1_ref[...] - e2_ref[...]).astype(mxu_dtype)

    # ScoreHead.dense: dist @ W_dense + b_dense   (bf16 x bf16 -> f32 acc)
    x = jnp.dot(dist, wd_ref[...], preferred_element_type=jnp.float32) + bd_ref[...]

    # exact ESM gelu: x * 0.5 * (1 + erf(x / sqrt(2)))   (f32 on the VPU/EUP)
    x = x * 0.5 * (1.0 + lax.erf(x * (1.0 / math.sqrt(2.0))))

    # LayerNorm over the *valid* d_model features (biased variance, like torch).
    # Padded feature columns are exactly zero, so plain sums give the right
    # mean; the centered term is masked before the variance sum when padded.
    inv_d = jnp.float32(1.0 / d_model)
    mean = jnp.sum(x, axis=-1, keepdims=True) * inv_d
    xc = x - mean
    if d_pad != d_model:
        feat = lax.broadcasted_iota(jnp.int32, x.shape, 1)
        xc = jnp.where(feat < d_model, xc, 0.0)
    var = jnp.sum(xc * xc, axis=-1, keepdims=True) * inv_d
    x = xc * lax.rsqrt(var + jnp.float32(eps)) * g_ref[...] + b_ref[...]

    # decoder (no bias) + separate bias parameter
    logits = jnp.dot(x.astype(mxu_dtype), wdec_ref[...],
                     preferred_element_type=jnp.float32) + bdec_ref[...]
    logits_ref[...] = logits                                     # (tile_b, Cp)

    # F.cross_entropy: summed per-row NLL for this tile (mean taken in wrapper)
    col = lax.broadcasted_iota(jnp.int32, logits.shape, 1)
    ml = logits
    if c_pad != num_classes:                     # mask padded class columns
        ml = jnp.where(col < num_classes, logits, jnp.float32(-1e30))
    m = jnp.max(ml, axis=-1, keepdims=True)
    lse = m + jnp.log(jnp.sum(jnp.exp(ml - m), axis=-1, keepdims=True))
    onehot = (col == labels_ref[...]).astype(jnp.float32)
    picked = jnp.sum(onehot * logits, axis=-1, keepdims=True)
    nll = lse - picked                                           # (tile_b, 1)
    if batch % tile_b:                           # mask ragged edge-tile rows
        row = pl.program_id(0) * tile_b + lax.broadcasted_iota(
            jnp.int32, nll.shape, 0)
        nll = jnp.where(row < batch, nll, 0.0)
    # Lane-dense (1, 128) store of the tile-summed NLL; wrapper reads lane 0.
    loss_ref[...] = jnp.broadcast_to(jnp.sum(nll), loss_ref.shape)


def prepare_params(params, *, mxu_dtype=jnp.bfloat16):
    """Pad/cast ScoreHead weights to lane/MXU-friendly shapes, once.

    Call this outside the per-step jit so the kernel invocation does no
    per-call weight padding / bf16 casting HBM traffic.
    """
    D = params["dense_w"].shape[0]
    C = params["decoder_w"].shape[1]
    Dp = _round_up(D, 128)
    Cp = _round_up(C, 128)
    return {
        "d_model": D,
        "num_classes": C,
        "dense_w": jnp.pad(params["dense_w"],
                           ((0, Dp - D), (0, Dp - D))).astype(mxu_dtype),
        "dense_b": jnp.pad(params["dense_b"], (0, Dp - D))
                      .reshape(1, Dp).astype(jnp.float32),
        "ln_g": jnp.pad(params["ln_g"], (0, Dp - D))
                   .reshape(1, Dp).astype(jnp.float32),
        "ln_b": jnp.pad(params["ln_b"], (0, Dp - D))
                   .reshape(1, Dp).astype(jnp.float32),
        "decoder_w": jnp.pad(params["decoder_w"],
                             ((0, Dp - D), (0, Cp - C))).astype(mxu_dtype),
        "head_bias": jnp.pad(params["head_bias"], (0, Cp - C))
                        .reshape(1, Cp).astype(jnp.float32),
    }


def sscorer_forward(embedding1, embedding2, labels, params, *, eps=1e-5,
                    tile_b=256):
    """SScorer.forward: returns (mean CE loss, logits[B, num_classes]).

    `params` may be raw ScoreHead weights (see init_params) or the output of
    prepare_params (preferred).  Embeddings are consumed in their native dtype
    (pass bf16 on v6e/v7x to halve the dominant input DMA bytes).
    """
    if "d_model" not in params:
        params = prepare_params(params)
    D = params["d_model"]
    C = params["num_classes"]
    mxu_dtype = params["dense_w"].dtype

    B = embedding1.shape[0]
    Dp = params["dense_w"].shape[0]
    Cp = params["decoder_w"].shape[1]

    # Adaptive batch tile: no wrapper-side batch padding (the kernel masks the
    # ragged edge tile).  Small batches shrink the tile; a tile that would
    # cover the whole batch is split so "parallel" has >= 2 grid steps (both
    # v7x TensorCores busy).
    e_bytes = jnp.dtype(embedding1.dtype).itemsize
    gran = max(8, 32 // e_bytes)                 # sublane granularity per dtype
    tile_b = max(gran, min(tile_b, _round_up(B, gran)))
    if B > 2 * gran and pl.cdiv(B, tile_b) < 2:
        tile_b = _round_up(pl.cdiv(B, 2), gran)
    ntiles = pl.cdiv(B, tile_b)

    # Only the feature axis ever needs padding (zero columns are exact no-ops
    # through dense/gelu/LN); the batch axis is consumed unpadded.
    e1 = embedding1 if Dp == D else jnp.pad(embedding1, ((0, 0), (0, Dp - D)))
    e2 = embedding2 if Dp == D else jnp.pad(embedding2, ((0, 0), (0, Dp - D)))
    lab = labels.astype(jnp.int32).reshape(B, 1)

    # Generation-aware VMEM budget (leave compiler scratch/spill headroom).
    w_bytes = jnp.dtype(mxu_dtype).itemsize
    vmem_cap = int(_vmem_capacity_bytes() * 0.8)

    def _vmem_limit(resident_bufs):
        resident = resident_bufs * ((Dp * Dp + Dp * Cp) * w_bytes
                                    + (4 * Dp + Cp) * 4)
        per_tile_io = 2 * (2 * tile_b * Dp * e_bytes + tile_b * 4
                           + tile_b * Cp * 4 + 128 * 4)
        temps = 3 * tile_b * Dp * 4 + 2 * tile_b * Cp * 4
        need = int((resident + per_tile_io + temps) * 1.5)
        return int(min(max(need, 32 << 20), vmem_cap))
    # TODO(synk): when the single-buffered bf16 dense_w alone exceeds ~60% of
    # vmem_cap (Dp >~ 4096 on v7x), add a K-tiling grid axis ("arbitrary") with
    # an f32 accumulator scratch instead of keeping the whole weight resident.

    cost = pl.CostEstimate(
        flops=2 * B * D * (D + C) + 12 * B * D,
        transcendentals=B * (D + C),
        bytes_accessed=(2 * B * D * e_bytes + (D * D + D * C) * w_bytes
                        + (4 * D + C) * 4 + B * C * 4 + B * 4 + ntiles * 512),
    )

    kernel = functools.partial(
        _sscorer_kernel, eps=float(eps), d_model=D, num_classes=C,
        batch=B, tile_b=tile_b, mxu_dtype=mxu_dtype)

    batch_tile = lambda i: (i, 0)
    resident_blk = lambda i: (0, 0)

    def _build(buffered_weights):
        # Resident operands: constant index_map so they are fetched once; with
        # Buffered(1) the pipeline also keeps only a single VMEM copy instead
        # of double-buffering Dp*(Dp+Cp) bf16.
        w_mode = (dict(pipeline_mode=pl.Buffered(1))
                  if buffered_weights else {})
        in_specs = [
            pl.BlockSpec((tile_b, Dp), batch_tile),           # embedding1 tile
            pl.BlockSpec((tile_b, Dp), batch_tile),           # embedding2 tile
            pl.BlockSpec((tile_b, 1), batch_tile),            # labels tile
            pl.BlockSpec((Dp, Dp), resident_blk, **w_mode),   # dense_w
            pl.BlockSpec((1, Dp), resident_blk, **w_mode),    # dense_b
            pl.BlockSpec((1, Dp), resident_blk, **w_mode),    # ln gamma
            pl.BlockSpec((1, Dp), resident_blk, **w_mode),    # ln beta
            pl.BlockSpec((Dp, Cp), resident_blk, **w_mode),   # decoder_w
            pl.BlockSpec((1, Cp), resident_blk, **w_mode),    # head bias
        ]
        return pl.pallas_call(
            kernel,
            grid=(ntiles,),
            in_specs=in_specs,
            out_specs=(
                pl.BlockSpec((tile_b, Cp), batch_tile),       # lane-dense logits
                pl.BlockSpec((1, 128), lambda i: (i, 0)),     # per-tile NLL sum
            ),
            out_shape=(
                jax.ShapeDtypeStruct((B, Cp), jnp.float32),
                jax.ShapeDtypeStruct((ntiles, 128), jnp.float32),
            ),
            compiler_params=pltpu.CompilerParams(
                dimension_semantics=("parallel",),
                vmem_limit_bytes=_vmem_limit(1 if buffered_weights else 2)),
            cost_estimate=cost,
        )

    args = (e1, e2, lab, params["dense_w"], params["dense_b"], params["ln_g"],
            params["ln_b"], params["decoder_w"], params["head_bias"])
    try:
        logits_p, loss_part = _build(True)(*args)
    except Exception:
        # Fallback for jax versions without BlockSpec.pipeline_mode support.
        logits_p, loss_part = _build(False)(*args)

    loss = jnp.sum(loss_part[:, 0]) / B     # mean reduction of F.cross_entropy
    return loss, logits_p[:, :C]


def init_params(key, d_model, num_classes):
    """Deterministic synthetic init matching ScoreHead.init_weights."""
    k1, k2 = jax.random.split(key)
    return {
        # nn.Linear weights init N(0, 0.02); stored already transposed to
        # [in, out] so the kernel computes x @ W.
        "dense_w": 0.02 * jax.random.normal(k1, (d_model, d_model), jnp.float32),
        "dense_b": jnp.zeros((d_model,), jnp.float32),
        "ln_g": jnp.ones((d_model,), jnp.float32),
        "ln_b": jnp.zeros((d_model,), jnp.float32),
        "decoder_w": 0.02 * jax.random.normal(k2, (d_model, num_classes), jnp.float32),
        "head_bias": jnp.zeros((num_classes,), jnp.float32),
    }


def _sscorer_reference(embedding1, embedding2, labels, params, *, eps=1e-5):
    """Pure-JAX f32 reference of SScorer.forward."""
    dist = jnp.abs(embedding1.astype(jnp.float32) - embedding2.astype(jnp.float32))
    x = dist @ params["dense_w"] + params["dense_b"]
    x = x * 0.5 * (1.0 + lax.erf(x / math.sqrt(2.0)))
    mean = jnp.mean(x, axis=-1, keepdims=True)
    var = jnp.mean((x - mean) ** 2, axis=-1, keepdims=True)
    x = (x - mean) / jnp.sqrt(var + eps) * params["ln_g"] + params["ln_b"]
    logits = x @ params["decoder_w"] + params["head_bias"]
    lse = jax.scipy.special.logsumexp(logits, axis=-1)
    picked = jnp.take_along_axis(logits, labels[:, None], axis=-1)[:, 0]
    return jnp.mean(lse - picked), logits


if __name__ == "__main__":
    B, D, C = 8, 32, 4  # batch, d_model, num_classes

    key = jax.random.PRNGKey(0)
    k_e1, k_e2, k_lab, k_par = jax.random.split(key, 4)

    embedding1 = jax.random.normal(k_e1, (B, D), jnp.float32)
    embedding2 = jax.random.normal(k_e2, (B, D), jnp.float32)
    labels = jax.random.randint(k_lab, (B,), 0, C, jnp.int32)

    params = init_params(k_par, D, C)
    prepared = prepare_params(params)          # pad/cast weights once

    loss, logits = sscorer_forward(embedding1, embedding2, labels, prepared)
    jax.block_until_ready((loss, logits))

    assert logits.shape == (B, C)
    assert loss.shape == ()

    # Loose check vs the pure-JAX f32 reference (kernel feeds bf16 to the MXU).
    ref_loss, ref_logits = _sscorer_reference(embedding1, embedding2, labels, params)
    assert jnp.allclose(logits, ref_logits, atol=3e-2, rtol=3e-2), "logits mismatch"
    assert jnp.allclose(loss, ref_loss, atol=3e-2, rtol=3e-2), "loss mismatch"

    print("KERNEL_OK")
</pallas_src>

<mosaic_0001>
module attributes {stable_mosaic.version = 11 : i64} {
  func.func @_sscorer_kernel(%arg0: i32, %arg1: memref<8x128xf32, #tpu.memory_space<vmem>>, %arg2: memref<8x128xf32, #tpu.memory_space<vmem>>, %arg3: memref<8x1xi32, #tpu.memory_space<vmem>>, %arg4: memref<128x128xbf16, #tpu.memory_space<vmem>>, %arg5: memref<1x128xf32, #tpu.memory_space<vmem>>, %arg6: memref<1x128xf32, #tpu.memory_space<vmem>>, %arg7: memref<1x128xf32, #tpu.memory_space<vmem>>, %arg8: memref<128x128xbf16, #tpu.memory_space<vmem>>, %arg9: memref<1x128xf32, #tpu.memory_space<vmem>>, %arg10: memref<8x128xf32, #tpu.memory_space<vmem>>, %arg11: memref<1x128xf32, #tpu.memory_space<vmem>>) attributes {dimension_semantics = [#tpu.dimension_semantics<parallel>], iteration_bounds = array<i64: 1>, scalar_prefetch = 0 : i64, scratch_operands = 0 : i64, tpu.core_type = #tpu.core_type<tc>, window_params = [{transform_indices = @transform_0, window_bounds = array<i64: 8, 128>}, {transform_indices = @transform_1, window_bounds = array<i64: 8, 128>}, {transform_indices = @transform_2, window_bounds = array<i64: 8, 1>}, {pipeline_mode = #tpu.pipeline_mode<synchronous>, transform_indices = @transform_3, window_bounds = array<i64: 128, 128>}, {pipeline_mode = #tpu.pipeline_mode<synchronous>, transform_indices = @transform_4, window_bounds = array<i64: 1, 128>}, {pipeline_mode = #tpu.pipeline_mode<synchronous>, transform_indices = @transform_5, window_bounds = array<i64: 1, 128>}, {pipeline_mode = #tpu.pipeline_mode<synchronous>, transform_indices = @transform_6, window_bounds = array<i64: 1, 128>}, {pipeline_mode = #tpu.pipeline_mode<synchronous>, transform_indices = @transform_7, window_bounds = array<i64: 128, 128>}, {pipeline_mode = #tpu.pipeline_mode<synchronous>, transform_indices = @transform_8, window_bounds = array<i64: 1, 128>}, {transform_indices = @transform_9, window_bounds = array<i64: 8, 128>}, {transform_indices = @transform_10, window_bounds = array<i64: 1, 128>}]} {
    %c0 = arith.constant 0 : index
    %c0_0 = arith.constant 0 : index
    %0 = vector.load %arg1[%c0, %c0_0] : memref<8x128xf32, #tpu.memory_space<vmem>>, vector<8x128xf32>
    %c0_1 = arith.constant 0 : index
    %c0_2 = arith.constant 0 : index
    %1 = vector.load %arg2[%c0_1, %c0_2] : memref<8x128xf32, #tpu.memory_space<vmem>>, vector<8x128xf32>
    %2 = arith.subf %0, %1 : vector<8x128xf32>
    %3 = math.absf %2 : vector<8x128xf32>
    %4 = arith.truncf %3 : vector<8x128xf32> to vector<8x128xbf16>
    %c0_3 = arith.constant 0 : index
    %c0_4 = arith.constant 0 : index
    %5 = vector.load %arg4[%c0_3, %c0_4] : memref<128x128xbf16, #tpu.memory_space<vmem>>, vector<128x128xbf16>
    %cst = arith.constant dense<0.000000e+00> : vector<8x128xf32>
    %6 = tpu.matmul %4, %5, %cst {dimension_numbers = #tpu.dot_dimension_numbers<[1], [0], [0], [1], [0, 0, 1, 1], [], []>} : vector<8x128xbf16>, vector<128x128xbf16>, vector<8x128xf32> -> vector<8x128xf32>
    %c0_5 = arith.constant 0 : index
    %c0_6 = arith.constant 0 : index
    %7 = vector.load %arg5[%c0_5, %c0_6] : memref<1x128xf32, #tpu.memory_space<vmem>>, vector<1x128xf32>
    %8 = vector.broadcast %7 : vector<1x128xf32> to vector<8x128xf32>
    %9 = arith.addf %6, %8 : vector<8x128xf32>
    %cst_7 = arith.constant 5.000000e-01 : f32
    %10 = vector.broadcast %cst_7 : f32 to vector<8x128xf32>
    %11 = arith.mulf %9, %10 : vector<8x128xf32>
    %cst_8 = arith.constant 0.707106769 : f32
    %12 = vector.broadcast %cst_8 : f32 to vector<8x128xf32>
    %13 = arith.mulf %9, %12 : vector<8x128xf32>
    %14 = math.erf %13 : vector<8x128xf32>
    %cst_9 = arith.constant 1.000000e+00 : f32
    %15 = vector.broadcast %cst_9 : f32 to vector<8x128xf32>
    %16 = arith.addf %15, %14 : vector<8x128xf32>
    %17 = arith.mulf %11, %16 : vector<8x128xf32>
    %cst_10 = arith.constant dense<0.000000e+00> : vector<8xf32>
    %18 = vector.multi_reduction <add>, %17, %cst_10 [1] : vector<8x128xf32> to vector<8xf32>
    %19 = vector.shape_cast %18 : vector<8xf32> to vector<8x1xf32>
    %cst_11 = arith.constant 3.125000e-02 : f32
    %20 = vector.broadcast %cst_11 : f32 to vector<8x1xf32>
    %21 = arith.mulf %19, %20 : vector<8x1xf32>
    %22 = vector.broadcast %21 : vector<8x1xf32> to vector<8x128xf32>
    %23 = arith.subf %17, %22 : vector<8x128xf32>
    %24 = tpu.iota {dimensions = array<i32: 1>} : vector<8x128xi32>
    %c32_i32 = arith.constant 32 : i32
    %25 = vector.broadcast %c32_i32 : i32 to vector<8x128xi32>
    %26 = arith.cmpi slt, %24, %25 : vector<8x128xi32>
    %cst_12 = arith.constant 0.000000e+00 : f32
    %27 = vector.broadcast %cst_12 : f32 to vector<8x128xf32>
    %28 = arith.select %26, %23, %27 : vector<8x128xi1>, vector<8x128xf32>
    %29 = arith.mulf %28, %28 : vector<8x128xf32>
    %cst_13 = arith.constant dense<0.000000e+00> : vector<8xf32>
    %30 = vector.multi_reduction <add>, %29, %cst_13 [1] : vector<8x128xf32> to vector<8xf32>
    %31 = vector.shape_cast %30 : vector<8xf32> to vector<8x1xf32>
    %cst_14 = arith.constant 3.125000e-02 : f32
    %32 = vector.broadcast %cst_14 : f32 to vector<8x1xf32>
    %33 = arith.mulf %31, %32 : vector<8x1xf32>
    %cst_15 = arith.constant 9.99999974E-6 : f32
    %34 = vector.broadcast %cst_15 : f32 to vector<8x1xf32>
    %35 = arith.addf %33, %34 : vector<8x1xf32>
    %36 = math.rsqrt %35 : vector<8x1xf32>
    %37 = vector.broadcast %36 : vector<8x1xf32> to vector<8x128xf32>
    %38 = arith.mulf %28, %37 : vector<8x128xf32>
    %c0_16 = arith.constant 0 : index
    %c0_17 = arith.constant 0 : index
    %39 = vector.load %arg6[%c0_16, %c0_17] : memref<1x128xf32, #tpu.memory_space<vmem>>, vector<1x128xf32>
    %40 = vector.broadcast %39 : vector<1x128xf32> to vector<8x128xf32>
    %41 = arith.mulf %38, %40 : vector<8x128xf32>
    %c0_18 = arith.constant 0 : index
    %c0_19 = arith.constant 0 : index
    %42 = vector.load %arg7[%c0_18, %c0_19] : memref<1x128xf32, #tpu.memory_space<vmem>>, vector<1x128xf32>
    %43 = vector.broadcast %42 : vector<1x128xf32> to vector<8x128xf32>
    %44 = arith.addf %41, %43 : vector<8x128xf32>
    %45 = arith.truncf %44 : vector<8x128xf32> to vector<8x128xbf16>
    %c0_20 = arith.constant 0 : index
    %c0_21 = arith.constant 0 : index
    %46 = vector.load %arg8[%c0_20, %c0_21] : memref<128x128xbf16, #tpu.memory_space<vmem>>, vector<128x128xbf16>
    %cst_22 = arith.constant dense<0.000000e+00> : vector<8x128xf32>
    %47 = tpu.matmul %45, %46, %cst_22 {dimension_numbers = #tpu.dot_dimension_numbers<[1], [0], [0], [1], [0, 0, 1, 1], [], []>} : vector<8x128xbf16>, vector<128x128xbf16>, vector<8x128xf32> -> vector<8x128xf32>
    %c0_23 = arith.constant 0 : index
    %c0_24 = arith.constant 0 : index
    %48 = vector.load %arg9[%c0_23, %c0_24] : memref<1x128xf32, #tpu.memory_space<vmem>>, vector<1x128xf32>
    %49 = vector.broadcast %48 : vector<1x128xf32> to vector<8x128xf32>
    %50 = arith.addf %47, %49 : vector<8x128xf32>
    %c0_25 = arith.constant 0 : index
    %c0_26 = arith.constant 0 : index
    %51 = vector.load %arg10[%c0_25, %c0_26] : memref<8x128xf32, #tpu.memory_space<vmem>>, vector<8x128xf32>
    tpu.vector_store %arg10[%c0_25, %c0_26], %50 {strides = array<i32>} : memref<8x128xf32, #tpu.memory_space<vmem>>, vector<8x128xf32>,
    %52 = tpu.iota {dimensions = array<i32: 1>} : vector<8x128xi32>
    %c4_i32 = arith.constant 4 : i32
    %53 = vector.broadcast %c4_i32 : i32 to vector<8x128xi32>
    %54 = arith.cmpi slt, %52, %53 : vector<8x128xi32>
    %cst_27 = arith.constant -1.000000e+30 : f32
    %55 = vector.broadcast %cst_27 : f32 to vector<8x128xf32>
    %56 = arith.select %54, %50, %55 : vector<8x128xi1>, vector<8x128xf32>
    %cst_28 = arith.constant dense<0xFF800000> : vector<8xf32>
    %57 = vector.multi_reduction <maximumf>, %56, %cst_28 [1] : vector<8x128xf32> to vector<8xf32>
    %58 = vector.shape_cast %57 : vector<8xf32> to vector<8x1xf32>
    %59 = vector.broadcast %58 : vector<8x1xf32> to vector<8x128xf32>
    %60 = arith.subf %56, %59 : vector<8x128xf32>
    %61 = math.exp %60 : vector<8x128xf32>
    %cst_29 = arith.constant dense<0.000000e+00> : vector<8xf32>
    %62 = vector.multi_reduction <add>, %61, %cst_29 [1] : vector<8x128xf32> to vector<8xf32>
    %63 = vector.shape_cast %62 : vector<8xf32> to vector<8x1xf32>
    %64 = math.log %63 : vector<8x1xf32>
    %65 = arith.addf %58, %64 : vector<8x1xf32>
    %c0_30 = arith.constant 0 : index
    %c0_31 = arith.constant 0 : index
    %66 = vector.load %arg3[%c0_30, %c0_31] : memref<8x1xi32, #tpu.memory_space<vmem>>, vector<8x1xi32>
    %67 = vector.broadcast %66 : vector<8x1xi32> to vector<8x128xi32>
    %68 = arith.cmpi eq, %52, %67 : vector<8x128xi32>
    %69 = arith.extui %68 : vector<8x128xi1> to vector<8x128xi32>
    %70 = arith.sitofp %69 : vector<8x128xi32> to vector<8x128xf32>
    %71 = arith.mulf %70, %50 : vector<8x128xf32>
    %cst_32 = arith.constant dense<0.000000e+00> : vector<8xf32>
    %72 = vector.multi_reduction <add>, %71, %cst_32 [1] : vector<8x128xf32> to vector<8xf32>
    %73 = vector.shape_cast %72 : vector<8xf32> to vector<8x1xf32>
    %74 = arith.subf %65, %73 : vector<8x1xf32>
    %75 = vector.shape_cast %74 : vector<8x1xf32> to vector<1x8x1xf32>
    %cst_33 = arith.constant dense<0.000000e+00> : vector<1xf32>
    %76 = vector.multi_reduction <add>, %75, %cst_33 [1, 2] : vector<1x8x1xf32> to vector<1xf32>
    %77 = vector.shape_cast %76 : vector<1xf32> to vector<1x1x1xf32>
    %78 = vector.extract %77[0, 0, 0] : f32 from vector<1x1x1xf32>
    %79 = vector.broadcast %78 : f32 to vector<1x128xf32>
    %c0_34 = arith.constant 0 : index
    %c0_35 = arith.constant 0 : index
    %80 = vector.load %arg11[%c0_34, %c0_35] : memref<1x128xf32, #tpu.memory_space<vmem>>, vector<1x128xf32>
    tpu.vector_store %arg11[%c0_34, %c0_35], %79 {strides = array<i32>} : memref<1x128xf32, #tpu.memory_space<vmem>>, vector<1x128xf32>,
    return
  }
  func.func @transform_0(%arg0: i32) -> (i32, i32) {
    %c0_i32 = arith.constant 0 : i32
    %c0_i32_0 = arith.constant 0 : i32
    return %arg0, %c0_i32 : i32, i32
  }
  func.func @transform_1(%arg0: i32) -> (i32, i32) {
    %c0_i32 = arith.constant 0 : i32
    %c0_i32_0 = arith.constant 0 : i32
    return %arg0, %c0_i32 : i32, i32
  }
  func.func @transform_2(%arg0: i32) -> (i32, i32) {
    %c0_i32 = arith.constant 0 : i32
    %c0_i32_0 = arith.constant 0 : i32
    return %arg0, %c0_i32 : i32, i32
  }
  func.func @transform_3(%arg0: i32) -> (i32, i32) {
    %c0_i32 = arith.constant 0 : i32
    %c0_i32_0 = arith.constant 0 : i32
    %c0_i32_1 = arith.constant 0 : i32
    return %c0_i32, %c0_i32_0 : i32, i32
  }
  func.func @transform_4(%arg0: i32) -> (i32, i32) {
    %c0_i32 = arith.constant 0 : i32
    %c0_i32_0 = arith.constant 0 : i32
    %c0_i32_1 = arith.constant 0 : i32
    return %c0_i32, %c0_i32_0 : i32, i32
  }
  func.func @transform_5(%arg0: i32) -> (i32, i32) {
    %c0_i32 = arith.constant 0 : i32
    %c0_i32_0 = arith.constant 0 : i32
    %c0_i32_1 = arith.constant 0 : i32
    return %c0_i32, %c0_i32_0 : i32, i32
  }
  func.func @transform_6(%arg0: i32) -> (i32, i32) {
    %c0_i32 = arith.constant 0 : i32
    %c0_i32_0 = arith.constant 0 : i32
    %c0_i32_1 = arith.constant 0 : i32
    return %c0_i32, %c0_i32_0 : i32, i32
  }
  func.func @transform_7(%arg0: i32) -> (i32, i32) {
    %c0_i32 = arith.constant 0 : i32
    %c0_i32_0 = arith.constant 0 : i32
    %c0_i32_1 = arith.constant 0 : i32
    return %c0_i32, %c0_i32_0 : i32, i32
  }
  func.func @transform_8(%arg0: i32) -> (i32, i32) {
    %c0_i32 = arith.constant 0 : i32
    %c0_i32_0 = arith.constant 0 : i32
    %c0_i32_1 = arith.constant 0 : i32
    return %c0_i32, %c0_i32_0 : i32, i32
  }
  func.func @transform_9(%arg0: i32) -> (i32, i32) {
    %c0_i32 = arith.constant 0 : i32
    %c0_i32_0 = arith.constant 0 : i32
    return %arg0, %c0_i32 : i32, i32
  }
  func.func @transform_10(%arg0: i32) -> (i32, i32) {
    %c0_i32 = arith.constant 0 : i32
    %c0_i32_0 = arith.constant 0 : i32
    return %arg0, %c0_i32 : i32, i32
  }
}

module attributes {stable_mosaic.version = 11 : i64} {
  func.func @_sscorer_kernel(%arg0: i32, %arg1: memref<8x128xf32, #tpu.memory_space<vmem>>, %arg2: memref<8x128xf32, #tpu.memory_space<vmem>>, %arg3: memref<8x1xi32, #tpu.memory_space<vmem>>, %arg4: memref<128x128xbf16, #tpu.memory_space<vmem>>, %arg5: memref<1x128xf32, #tpu.memory_space<vmem>>, %arg6: memref<1x128xf32, #tpu.memory_space<vmem>>, %arg7: memref<1x128xf32, #tpu.memory_space<vmem>>, %arg8: memref<128x128xbf16, #tpu.memory_space<vmem>>, %arg9: memref<1x128xf32, #tpu.memory_space<vmem>>, %arg10: memref<8x128xf32, #tpu.memory_space<vmem>>, %arg11: memref<1x128xf32, #tpu.memory_space<vmem>>) attributes {dimension_semantics = [#tpu.dimension_semantics<parallel>], iteration_bounds = array<i64: 1>, scalar_prefetch = 0 : i64, scratch_operands = 0 : i64, tpu.core_type = #tpu.core_type<tc>, window_params = [{transform_indices = @transform_0, window_bounds = array<i64: 8, 128>}, {transform_indices = @transform_1, window_bounds = array<i64: 8, 128>}, {transform_indices = @transform_2, window_bounds = array<i64: 8, 1>}, {pipeline_mode = #tpu.pipeline_mode<synchronous>, transform_indices = @transform_3, window_bounds = array<i64: 128, 128>}, {pipeline_mode = #tpu.pipeline_mode<synchronous>, transform_indices = @transform_4, window_bounds = array<i64: 1, 128>}, {pipeline_mode = #tpu.pipeline_mode<synchronous>, transform_indices = @transform_5, window_bounds = array<i64: 1, 128>}, {pipeline_mode = #tpu.pipeline_mode<synchronous>, transform_indices = @transform_6, window_bounds = array<i64: 1, 128>}, {pipeline_mode = #tpu.pipeline_mode<synchronous>, transform_indices = @transform_7, window_bounds = array<i64: 128, 128>}, {pipeline_mode = #tpu.pipeline_mode<synchronous>, transform_indices = @transform_8, window_bounds = array<i64: 1, 128>}, {transform_indices = @transform_9, window_bounds = array<i64: 8, 128>}, {transform_indices = @transform_10, window_bounds = array<i64: 1, 128>}]} {
    %c0 = arith.constant 0 : index
    %c0_0 = arith.constant 0 : index
    %0 = vector.load %arg1[%c0, %c0_0] : memref<8x128xf32, #tpu.memory_space<vmem>>, vector<8x128xf32>
    %c0_1 = arith.constant 0 : index
    %c0_2 = arith.constant 0 : index
    %1 = vector.load %arg2[%c0_1, %c0_2] : memref<8x128xf32, #tpu.memory_space<vmem>>, vector<8x128xf32>
    %2 = arith.subf %0, %1 : vector<8x128xf32>
    %3 = math.absf %2 : vector<8x128xf32>
    %4 = arith.truncf %3 : vector<8x128xf32> to vector<8x128xbf16>
    %c0_3 = arith.constant 0 : index
    %c0_4 = arith.constant 0 : index
    %5 = vector.load %arg4[%c0_3, %c0_4] : memref<128x128xbf16, #tpu.memory_space<vmem>>, vector<128x128xbf16>
    %cst = arith.constant dense<0.000000e+00> : vector<8x128xf32>
    %6 = tpu.matmul %4, %5, %cst {dimension_numbers = #tpu.dot_dimension_numbers<[1], [0], [0], [1], [0, 0, 1, 1], [], []>} : vector<8x128xbf16>, vector<128x128xbf16>, vector<8x128xf32> -> vector<8x128xf32>
    %c0_5 = arith.constant 0 : index
    %c0_6 = arith.constant 0 : index
    %7 = vector.load %arg5[%c0_5, %c0_6] : memref<1x128xf32, #tpu.memory_space<vmem>>, vector<1x128xf32>
    %8 = vector.broadcast %7 : vector<1x128xf32> to vector<8x128xf32>
    %9 = arith.addf %6, %8 : vector<8x128xf32>
    %cst_7 = arith.constant 5.000000e-01 : f32
    %10 = vector.broadcast %cst_7 : f32 to vector<8x128xf32>
    %11 = arith.mulf %9, %10 : vector<8x128xf32>
    %cst_8 = arith.constant 0.707106769 : f32
    %12 = vector.broadcast %cst_8 : f32 to vector<8x128xf32>
    %13 = arith.mulf %9, %12 : vector<8x128xf32>
    %14 = math.erf %13 : vector<8x128xf32>
    %cst_9 = arith.constant 1.000000e+00 : f32
    %15 = vector.broadcast %cst_9 : f32 to vector<8x128xf32>
    %16 = arith.addf %15, %14 : vector<8x128xf32>
    %17 = arith.mulf %11, %16 : vector<8x128xf32>
    %cst_10 = arith.constant dense<0.000000e+00> : vector<8xf32>
    %18 = vector.multi_reduction <add>, %17, %cst_10 [1] : vector<8x128xf32> to vector<8xf32>
    %19 = vector.shape_cast %18 : vector<8xf32> to vector<8x1xf32>
    %cst_11 = arith.constant 3.125000e-02 : f32
    %20 = vector.broadcast %cst_11 : f32 to vector<8x1xf32>
    %21 = arith.mulf %19, %20 : vector<8x1xf32>
    %22 = vector.broadcast %21 : vector<8x1xf32> to vector<8x128xf32>
    %23 = arith.subf %17, %22 : vector<8x128xf32>
    %24 = tpu.iota {dimensions = array<i32: 1>} : vector<8x128xi32>
    %c32_i32 = arith.constant 32 : i32
    %25 = vector.broadcast %c32_i32 : i32 to vector<8x128xi32>
    %26 = arith.cmpi slt, %24, %25 : vector<8x128xi32>
    %cst_12 = arith.constant 0.000000e+00 : f32
    %27 = vector.broadcast %cst_12 : f32 to vector<8x128xf32>
    %28 = arith.select %26, %23, %27 : vector<8x128xi1>, vector<8x128xf32>
    %29 = arith.mulf %28, %28 : vector<8x128xf32>
    %cst_13 = arith.constant dense<0.000000e+00> : vector<8xf32>
    %30 = vector.multi_reduction <add>, %29, %cst_13 [1] : vector<8x128xf32> to vector<8xf32>
    %31 = vector.shape_cast %30 : vector<8xf32> to vector<8x1xf32>
    %cst_14 = arith.constant 3.125000e-02 : f32
    %32 = vector.broadcast %cst_14 : f32 to vector<8x1xf32>
    %33 = arith.mulf %31, %32 : vector<8x1xf32>
    %cst_15 = arith.constant 9.99999974E-6 : f32
    %34 = vector.broadcast %cst_15 : f32 to vector<8x1xf32>
    %35 = arith.addf %33, %34 : vector<8x1xf32>
    %36 = math.rsqrt %35 : vector<8x1xf32>
    %37 = vector.broadcast %36 : vector<8x1xf32> to vector<8x128xf32>
    %38 = arith.mulf %28, %37 : vector<8x128xf32>
    %c0_16 = arith.constant 0 : index
    %c0_17 = arith.constant 0 : index
    %39 = vector.load %arg6[%c0_16, %c0_17] : memref<1x128xf32, #tpu.memory_space<vmem>>, vector<1x128xf32>
    %40 = vector.broadcast %39 : vector<1x128xf32> to vector<8x128xf32>
    %41 = arith.mulf %38, %40 : vector<8x128xf32>
    %c0_18 = arith.constant 0 : index
    %c0_19 = arith.constant 0 : index
    %42 = vector.load %arg7[%c0_18, %c0_19] : memref<1x128xf32, #tpu.memory_space<vmem>>, vector<1x128xf32>
    %43 = vector.broadcast %42 : vector<1x128xf32> to vector<8x128xf32>
    %44 = arith.addf %41, %43 : vector<8x128xf32>
    %45 = arith.truncf %44 : vector<8x128xf32> to vector<8x128xbf16>
    %c0_20 = arith.constant 0 : index
    %c0_21 = arith.constant 0 : index
    %46 = vector.load %arg8[%c0_20, %c0_21] : memref<128x128xbf16, #tpu.memory_space<vmem>>, vector<128x128xbf16>
    %cst_22 = arith.constant dense<0.000000e+00> : vector<8x128xf32>
    %47 = tpu.matmul %45, %46, %cst_22 {dimension_numbers = #tpu.dot_dimension_numbers<[1], [0], [0], [1], [0, 0, 1, 1], [], []>} : vector<8x128xbf16>, vector<128x128xbf16>, vector<8x128xf32> -> vector<8x128xf32>
    %c0_23 = arith.constant 0 : index
    %c0_24 = arith.constant 0 : index
    %48 = vector.load %arg9[%c0_23, %c0_24] : memref<1x128xf32, #tpu.memory_space<vmem>>, vector<1x128xf32>
    %49 = vector.broadcast %48 : vector<1x128xf32> to vector<8x128xf32>
    %50 = arith.addf %47, %49 : vector<8x128xf32>
    %c0_25 = arith.constant 0 : index
    %c0_26 = arith.constant 0 : index
    %51 = vector.load %arg10[%c0_25, %c0_26] : memref<8x128xf32, #tpu.memory_space<vmem>>, vector<8x128xf32>
    tpu.vector_store %arg10[%c0_25, %c0_26], %50 {strides = array<i32>} : memref<8x128xf32, #tpu.memory_space<vmem>>, vector<8x128xf32>,
    %52 = tpu.iota {dimensions = array<i32: 1>} : vector<8x128xi32>
    %c4_i32 = arith.constant 4 : i32
    %53 = vector.broadcast %c4_i32 : i32 to vector<8x128xi32>
    %54 = arith.cmpi slt, %52, %53 : vector<8x128xi32>
    %cst_27 = arith.constant -1.000000e+30 : f32
    %55 = vector.broadcast %cst_27 : f32 to vector<8x128xf32>
    %56 = arith.select %54, %50, %55 : vector<8x128xi1>, vector<8x128xf32>
    %cst_28 = arith.constant dense<0xFF800000> : vector<8xf32>
    %57 = vector.multi_reduction <maximumf>, %56, %cst_28 [1] : vector<8x128xf32> to vector<8xf32>
    %58 = vector.shape_cast %57 : vector<8xf32> to vector<8x1xf32>
    %59 = vector.broadcast %58 : vector<8x1xf32> to vector<8x128xf32>
    %60 = arith.subf %56, %59 : vector<8x128xf32>
    %61 = math.exp %60 : vector<8x128xf32>
    %cst_29 = arith.constant dense<0.000000e+00> : vector<8xf32>
    %62 = vector.multi_reduction <add>, %61, %cst_29 [1] : vector<8x128xf32> to vector<8xf32>
    %63 = vector.shape_cast %62 : vector<8xf32> to vector<8x1xf32>
    %64 = math.log %63 : vector<8x1xf32>
    %65 = arith.addf %58, %64 : vector<8x1xf32>
    %c0_30 = arith.constant 0 : index
    %c0_31 = arith.constant 0 : index
    %66 = vector.load %arg3[%c0_30, %c0_31] : memref<8x1xi32, #tpu.memory_space<vmem>>, vector<8x1xi32>
    %67 = vector.broadcast %66 : vector<8x1xi32> to vector<8x128xi32>
    %68 = arith.cmpi eq, %52, %67 : vector<8x128xi32>
    %69 = arith.extui %68 : vector<8x128xi1> to vector<8x128xi32>
    %70 = arith.sitofp %69 : vector<8x128xi32> to vector<8x128xf32>
    %71 = arith.mulf %70, %50 : vector<8x128xf32>
    %cst_32 = arith.constant dense<0.000000e+00> : vector<8xf32>
    %72 = vector.multi_reduction <add>, %71, %cst_32 [1] : vector<8x128xf32> to vector<8xf32>
    %73 = vector.shape_cast %72 : vector<8xf32> to vector<8x1xf32>
    %74 = arith.subf %65, %73 : vector<8x1xf32>
    %75 = vector.shape_cast %74 : vector<8x1xf32> to vector<1x8x1xf32>
    %cst_33 = arith.constant dense<0.000000e+00> : vector<1xf32>
    %76 = vector.multi_reduction <add>, %75, %cst_33 [1, 2] : vector<1x8x1xf32> to vector<1xf32>
    %77 = vector.shape_cast %76 : vector<1xf32> to vector<1x1x1xf32>
    %78 = vector.extract %77[0, 0, 0] : f32 from vector<1x1x1xf32>
    %79 = vector.broadcast %78 : f32 to vector<1x128xf32>
    %c0_34 = arith.constant 0 : index
    %c0_35 = arith.constant 0 : index
    %80 = vector.load %arg11[%c0_34, %c0_35] : memref<1x128xf32, #tpu.memory_space<vmem>>, vector<1x128xf32>
    tpu.vector_store %arg11[%c0_34, %c0_35], %79 {strides = array<i32>} : memref<1x128xf32, #tpu.memory_space<vmem>>, vector<1x128xf32>,
    return
  }
  func.func @transform_0(%arg0: i32) -> (i32, i32) {
    %c0_i32 = arith.constant 0 : i32
    %c0_i32_0 = arith.constant 0 : i32
    return %arg0, %c0_i32 : i32, i32
  }
  func.func @transform_1(%arg0: i32) -> (i32, i32) {
    %c0_i32 = arith.constant 0 : i32
    %c0_i32_0 = arith.constant 0 : i32
    return %arg0, %c0_i32 : i32, i32
  }
  func.func @transform_2(%arg0: i32) -> (i32, i32) {
    %c0_i32 = arith.constant 0 : i32
    %c0_i32_0 = arith.constant 0 : i32
    return %arg0, %c0_i32 : i32, i32
  }
  func.func @transform_3(%arg0: i32) -> (i32, i32) {
    %c0_i32 = arith.constant 0 : i32
    %c0_i32_0 = arith.constant 0 : i32
    %c0_i32_1 = arith.constant 0 : i32
    return %c0_i32, %c0_i32_0 : i32, i32
  }
  func.func @transform_4(%arg0: i32) -> (i32, i32) {
    %c0_i32 = arith.constant 0 : i32
    %c0_i32_0 = arith.constant 0 : i32
    %c0_i32_1 = arith.constant 0 : i32
    return %c0_i32, %c0_i32_0 : i32, i32
  }
  func.func @transform_5(%arg0: i32) -> (i32, i32) {
    %c0_i32 = arith.constant 0 : i32
    %c0_i32_0 = arith.constant 0 : i32
    %c0_i32_1 = arith.constant 0 : i32
    return %c0_i32, %c0_i32_0 : i32, i32
  }
  func.func @transform_6(%arg0: i32) -> (i32, i32) {
    %c0_i32 = arith.constant 0 : i32
    %c0_i32_0 = arith.constant 0 : i32
    %c0_i32_1 = arith.constant 0 : i32
    return %c0_i32, %c0_i32_0 : i32, i32
  }
  func.func @transform_7(%arg0: i32) -> (i32, i32) {
    %c0_i32 = arith.constant 0 : i32
    %c0_i32_0 = arith.constant 0 : i32
    %c0_i32_1 = arith.constant 0 : i32
    return %c0_i32, %c0_i32_0 : i32, i32
  }
  func.func @transform_8(%arg0: i32) -> (i32, i32) {
    %c0_i32 = arith.constant 0 : i32
    %c0_i32_0 = arith.constant 0 : i32
    %c0_i32_1 = arith.constant 0 : i32
    return %c0_i32, %c0_i32_0 : i32, i32
  }
  func.func @transform_9(%arg0: i32) -> (i32, i32) {
    %c0_i32 = arith.constant 0 : i32
    %c0_i32_0 = arith.constant 0 : i32
    return %arg0, %c0_i32 : i32, i32
  }
  func.func @transform_10(%arg0: i32) -> (i32, i32) {
    %c0_i32 = arith.constant 0 : i32
    %c0_i32_0 = arith.constant 0 : i32
    return %arg0, %c0_i32 : i32, i32
  }
}

</mosaic_0001>

<llo_original>
// kernel: tpu_custom_call.1
$region0: #{tpu_custom_call.1}
  #allocation0 [shape = 'u32[]', space=smem, size = 0x4, offset = 0x4, fixed_abs, tag = 'smem constant byte address 0x4 - core index']
  #allocation1 [shape = 'u32[144,128]{1,0:T(1,128)}', space=vmem, size = 0x12000, scoped, tag = 'internal scratch']
  %s0 = inlined_call_operand.vmem [shape: f32[8,128], index: 0, kind: input, shape index: {}]
  %s1 = inlined_call_operand.hbm [shape: f32[8,128], index: 1, kind: input, shape index: {}]
  %s2 = inlined_call_operand.vmem [shape: s32[8,1], index: 2, kind: input, shape index: {}]
  %s3 = inlined_call_operand.hbm [shape: bf16[128,128], index: 3, kind: input, shape index: {}]
  %s4 = inlined_call_operand.vmem [shape: f32[1,128], index: 4, kind: input, shape index: {}]
  %s5 = inlined_call_operand.vmem [shape: f32[1,128], index: 5, kind: input, shape index: {}]
  %s6 = inlined_call_operand.vmem [shape: f32[1,128], index: 6, kind: input, shape index: {}]
  %s7 = inlined_call_operand.hbm [shape: bf16[128,128], index: 7, kind: input, shape index: {}]
  %s8 = inlined_call_operand.vmem [shape: f32[1,128], index: 8, kind: input, shape index: {}]
  %s9 = inlined_call_operand.hbm [shape: f32[8,128], index: 9, kind: output, shape index: {0}]
  %s10 = inlined_call_operand.hbm [shape: f32[1,128], index: 10, kind: output, shape index: {1}]
  %11 = xla_tuple %s9, %s10
  %s12 = sld [smem:[#allocation0]]
  $region66: #{tpu_custom_call.1} parent=0
    _
  %s14 = ssub.s32 1, %s12
  %s15 = scalar_select 0, %s14, %s12
  $region1: #{tpu_custom_call.1} parent=0
    #allocation2 [shape = 'u8[4096]{0}', space=vmem, size = 0x1000, scoped, tag = 'input window, operand 1, single buffered']
    #allocation3 [shape = 's32[1]{0}', space=sflag, size = 0x4, scoped, tag = 'scoped memory for tpu_custom_call.1']
    #allocation4 [shape = 's32[1]{0}', space=sflag, size = 0x4, scoped, tag = 'scoped memory for tpu_custom_call.1']
    #allocation5 [shape = 'u8[32768]{0}', space=vmem, size = 0x8000, scoped, tag = 'input window, operand 3, single buffered']
    #allocation6 [shape = 's32[1]{0}', space=sflag, size = 0x4, scoped, tag = 'scoped memory for tpu_custom_call.1']
    #allocation7 [shape = 'u8[32768]{0}', space=vmem, size = 0x8000, scoped, tag = 'input window, operand 7, single buffered']
    #allocation8 [shape = 'u8[4096]{0}', space=vmem, size = 0x1000, scoped, tag = 'output window, operand 0, single buffered']
    #allocation9 [shape = 'u8[512]{0}', space=vmem, size = 0x400, scoped, tag = 'output window, operand 1, single buffered']
    #allocation10 [shape = 's32[1]{0}', space=sflag, size = 0x4, scoped, tag = 'scoped memory for tpu_custom_call.1']
    %16 = vsyncpa [#allocation3], 0
    %17 = vsyncpa [#allocation6], 0
    %18 = vsyncpa [#allocation4], 0
    %19 = vsyncpa [#allocation10], 0
    // Predicated region
    $region2: #{tpu_custom_call.1} parent=1 // pred_check
      _
    $region3: #{tpu_custom_call.1} parent=1 // pred_check_branch
      %21 = sbr.rel (0) target = $region5
    $region4: #{tpu_custom_call.1} parent=1 // pred_region
      _
    $region5: #{tpu_custom_call.1} parent=1 // pred_fallthru
      _
    // Predicated region
    $region6: #{tpu_custom_call.1} parent=1 // pred_check
      _
    $region7: #{tpu_custom_call.1} parent=1 // pred_check_branch
      %23 = sbr.rel (0) target = $region9
    $region8: #{tpu_custom_call.1} parent=1 // pred_region
      %s25 = ssub.s32 128, 128
      %26 = vsyncadd [#allocation3], %s25
      %s28 = sshll.u32 [#allocation2], 4
      %s29 = int_to_ptr.vmem [resolvable:$true] %s28
      %31 = dma.hbm_to_vmem [thread:$0]  %s1, 128, %s29, [#allocation3]
    $region9: #{tpu_custom_call.1} parent=1 // pred_fallthru
      _
    // Predicated region
    $region10: #{tpu_custom_call.1} parent=1 // pred_check
      _
    $region11: #{tpu_custom_call.1} parent=1 // pred_check_branch
      %33 = sbr.rel (0) target = $region13
    $region12: #{tpu_custom_call.1} parent=1 // pred_region
      _
    $region13: #{tpu_custom_call.1} parent=1 // pred_fallthru
      _
    // Predicated region
    $region14: #{tpu_custom_call.1} parent=1 // pred_check
      _
    $region15: #{tpu_custom_call.1} parent=1 // pred_check_branch
      %35 = sbr.rel (0) target = $region17
    $region16: #{tpu_custom_call.1} parent=1 // pred_region
      %s37 = ssub.s32 1024, 1024
      %38 = vsyncadd [#allocation6], %s37
      %s39 = sshll.u32 [#allocation5], 4
      %s40 = int_to_ptr.vmem [resolvable:$true] %s39
      %45 = dma.hbm_to_vmem [thread:$0]  %s3, 1024, %s40, [#allocation6], 64, 64, 4
    $region17: #{tpu_custom_call.1} parent=1 // pred_fallthru
      _
    // Predicated region
    $region18: #{tpu_custom_call.1} parent=1 // pred_check
      _
    $region19: #{tpu_custom_call.1} parent=1 // pred_check_branch
      %47 = sbr.rel (0) target = $region21
    $region20: #{tpu_custom_call.1} parent=1 // pred_region
      _
    $region21: #{tpu_custom_call.1} parent=1 // pred_fallthru
      _
    // Predicated region
    $region22: #{tpu_custom_call.1} parent=1 // pred_check
      _
    $region23: #{tpu_custom_call.1} parent=1 // pred_check_branch
      %49 = sbr.rel (0) target = $region25
    $region24: #{tpu_custom_call.1} parent=1 // pred_region
      _
    $region25: #{tpu_custom_call.1} parent=1 // pred_fallthru
      _
    // Predicated region
    $region26: #{tpu_custom_call.1} parent=1 // pred_check
      _
    $region27: #{tpu_custom_call.1} parent=1 // pred_check_branch
      %51 = sbr.rel (0) target = $region29
    $region28: #{tpu_custom_call.1} parent=1 // pred_region
      _
    $region29: #{tpu_custom_call.1} parent=1 // pred_fallthru
      _
    // Predicated region
    $region30: #{tpu_custom_call.1} parent=1 // pred_check
      _
    $region31: #{tpu_custom_call.1} parent=1 // pred_check_branch
      %53 = sbr.rel (0) target = $region33
    $region32: #{tpu_custom_call.1} parent=1 // pred_region
      %s55 = ssub.s32 1024, 1024
      %56 = vsyncadd [#allocation6], %s55
      %s57 = sshll.u32 [#allocation7], 4
      %s58 = int_to_ptr.vmem [resolvable:$true] %s57
      %63 = dma.hbm_to_vmem [thread:$0]  %s7, 1024, %s58, [#allocation6], 64, 64, 4
    $region33: #{tpu_custom_call.1} parent=1 // pred_fallthru
      _
    // Predicated region
    $region34: #{tpu_custom_call.1} parent=1 // pred_check
      _
    $region35: #{tpu_custom_call.1} parent=1 // pred_check_branch
      %65 = sbr.rel (0) target = $region37
    $region36: #{tpu_custom_call.1} parent=1 // pred_region
      _
    $region37: #{tpu_custom_call.1} parent=1 // pred_fallthru
      _
    // Predicated region
    $region38: #{tpu_custom_call.1} parent=1 // pred_check
      _
    $region39: #{tpu_custom_call.1} parent=1 // pred_check_branch
      %67 = sbr.rel (0) target = $region41
    $region40: #{tpu_custom_call.1} parent=1 // pred_region
      %68 = dma.done [#allocation3], 128
    $region41: #{tpu_custom_call.1} parent=1 // pred_fallthru
      _
    // Predicated region
    $region42: #{tpu_custom_call.1} parent=1 // pred_check
      _
    $region43: #{tpu_custom_call.1} parent=1 // pred_check_branch
      %70 = sbr.rel (0) target = $region45
    $region44: #{tpu_custom_call.1} parent=1 // pred_region
      %71 = dma.done [#allocation6], 1024
    $region45: #{tpu_custom_call.1} parent=1 // pred_fallthru
      _
    // Predicated region
    $region46: #{tpu_custom_call.1} parent=1 // pred_check
      _
    $region47: #{tpu_custom_call.1} parent=1 // pred_check_branch
      %73 = sbr.rel (0) target = $region49
    $region48: #{tpu_custom_call.1} parent=1 // pred_region
      %74 = dma.done [#allocation6], 1024
    $region49: #{tpu_custom_call.1} parent=1 // pred_fallthru
      _
    %v76 = vld [vmem:[%s0] sm:$0xff]
    %v77 = vld [vmem:[#allocation2] sm:$0xff]
    %v78 = vsub.f32 %v76, %v77
    %v79 = vand.u32 2147483647, %v78
    %v80 = vpack.c.bf16 %v79, %v79
    %v81 = vld [vmem:[#allocation5] sm:$0xf]
    %v82 = vld [vmem:[#allocation5 + $0x4] sm:$0xf]
    %v83 = vld [vmem:[#allocation5 + $0x8] sm:$0xf]
    %v84 = vld [vmem:[#allocation5 + $0xc] sm:$0xf]
    %v85 = vld [vmem:[#allocation5 + $0x10] sm:$0xf]
    %v86 = vld [vmem:[#allocation5 + $0x14] sm:$0xf]
    %v87 = vld [vmem:[#allocation5 + $0x18] sm:$0xf]
    %v88 = vld [vmem:[#allocation5 + $0x1c] sm:$0xf]
    %v89 = vld [vmem:[#allocation5 + $0x20] sm:$0xf]
    %v90 = vld [vmem:[#allocation5 + $0x24] sm:$0xf]
    %v91 = vld [vmem:[#allocation5 + $0x28] sm:$0xf]
    %v92 = vld [vmem:[#allocation5 + $0x2c] sm:$0xf]
    %v93 = vld [vmem:[#allocation5 + $0x30] sm:$0xf]
    %v94 = vld [vmem:[#allocation5 + $0x34] sm:$0xf]
    %v95 = vld [vmem:[#allocation5 + $0x38] sm:$0xf]
    %v96 = vld [vmem:[#allocation5 + $0x3c] sm:$0xf]
    %v97 = vld [vmem:[%s4] sm:$0x1]
    %v99 = vlaneseq
    %v100 = vshrl.u32 %v99, 7
    %v101 = vsub.s32 0, %v100
    %v102 = vrot.slane %v97, %v101
    %v120 = vunpack.c.l.b16 %v81
    %v121 = vunpack.c.l.b16 %v82
    %v122 = vunpack.c.l.b16 %v83
    %v123 = vunpack.c.l.b16 %v84
    %v124 = vunpack.c.l.b16 %v85
    %v125 = vunpack.c.l.b16 %v86
    %v126 = vunpack.c.l.b16 %v87
    %v127 = vunpack.c.l.b16 %v88
    %v128 = vunpack.c.l.b16 %v89
    %v129 = vunpack.c.l.b16 %v90
    %v130 = vunpack.c.l.b16 %v91
    %v131 = vunpack.c.l.b16 %v92
    %v132 = vunpack.c.l.b16 %v93
    %v133 = vunpack.c.l.b16 %v94
    %v134 = vunpack.c.l.b16 %v95
    %v135 = vunpack.c.l.b16 %v96
    %v136 = vpack.c.b16 %v121, %v120
    %v137 = vpack.c.b16 %v123, %v122
    %v138 = vpack.c.b16 %v125, %v124
    %v139 = vpack.c.b16 %v127, %v126
    %v140 = vpack.c.b16 %v129, %v128
    %v141 = vpack.c.b16 %v131, %v130
    %v142 = vpack.c.b16 %v133, %v132
    %v143 = vpack.c.b16 %v135, %v134
    %152 = vmatprep.subr.bf16.mxu0 0
    %153 = vmatpush1.bf16.msra.mxu0 %v136
    %154 = vmatprep.subr.bf16.mxu0 0
    %155 = vmatpush1.bf16.msra.mxu0 %v137
    %156 = vmatprep.subr.bf16.mxu0 0
    %157 = vmatpush1.bf16.msra.mxu0 %v138
    %158 = vmatprep.subr.bf16.mxu0 0
    %159 = vmatpush1.bf16.msra.mxu0 %v139
    %160 = vmatprep.subr.bf16.mxu0 0
    %161 = vmatpush1.bf16.msra.mxu0 %v140
    %162 = vmatprep.subr.bf16.mxu0 0
    %163 = vmatpush1.bf16.msra.mxu0 %v141
    %164 = vmatprep.subr.bf16.mxu0 0
    %165 = vmatpush1.bf16.msra.mxu0 %v142
    %166 = vmatprep.subr.bf16.mxu0 0
    %167 = vmatpush1.bf16.msra.mxu0 %v143
    %168 = vmatprep.subr.bf16.mxu0 0
    %169 = vmatpush1.bf16.msra.mxu0 0
    %170 = vmatprep.subr.bf16.mxu0 0
    %171 = vmatpush1.bf16.msra.mxu0 0
    %172 = vmatprep.subr.bf16.mxu0 0
    %173 = vmatpush1.bf16.msra.mxu0 0
    %174 = vmatprep.subr.bf16.mxu0 0
    %175 = vmatpush1.bf16.msra.mxu0 0
    %176 = vmatprep.subr.bf16.mxu0 0
    %177 = vmatpush1.bf16.msra.mxu0 0
    %178 = vmatprep.subr.bf16.mxu0 0
    %179 = vmatpush1.bf16.msra.mxu0 0
    %180 = vmatprep.subr.bf16.mxu0 0
    %181 = vmatpush1.bf16.msra.mxu0 0
    %182 = vmatprep.subr.bf16.mxu0 0
    %183 = vmatpush1.bf16.msra.mxu0 0
    %184 = vmatprep.mubr.bf16.mxu0 0
    %185 = vmatmul.mubr.bf16.gmra.mrb[0].mxu0 %v80
    %v186 = vpop.f32.mrb[0].mxu0
    %v187 = vadd.f32 %v102, %v186
    %v188 = vpop.f32.mrb[0].mxu0
    %v189 = vpop.f32.mrb[0].mxu0
    %v190 = vpop.f32.mrb[0].mxu0
    %191 = vdwg.mxu0
    %v192 = vmul.f32 %v187, 0.5
    %v193 = vmul.f32 %v187, 0.70710677
    %v194 = verf.f32.pop %v193
    %v195 = vadd.f32 %v194, 1.0
    %v196 = vmul.f32 %v192, %v195
    %197 = vadd.xlane.f32.xlu0 %v196
    %v198 = vpop.xlane.xlu0 %197
    %v199 = vmul.f32 %v198, 0.03125
    %v200 = vsub.f32 %v196, %v199
    %v201 = vlaneseq
    %v202 = vand.u32 %v201, 127
    %vm203 = vcmp.lt.s32.totalorder %v202, 32
    %v204 = vsel %vm203, %v200, 0.0
    %v205 = vmul.f32 %v204, %v204
    %206 = vadd.xlane.f32.xlu0 %v205
    %v207 = vpop.xlane.xlu0 %206
    %v208 = vmul.f32 %v207, 0.03125
    %v209 = vadd.f32 %v208, 1e-05
    %v210 = vrsqrt.pop %v209
    %v211 = vmul.f32 %v204, %v210
    %v212 = vld [vmem:[%s5] sm:$0x1]
    %v214 = vlaneseq
    %v215 = vshrl.u32 %v214, 7
    %v216 = vsub.s32 0, %v215
    %v217 = vrot.slane %v212, %v216
    %v219 = vmul.f32 %v211, %v217
    %v220 = vld [vmem:[%s6] sm:$0x1]
    %v222 = vlaneseq
    %v223 = vshrl.u32 %v222, 7
    %v224 = vsub.s32 0, %v223
    %v225 = vrot.slane %v220, %v224
    %v227 = vadd.f32 %v219, %v225
    %v228 = vpack.c.bf16 %v227, %v227
    %v229 = vld [vmem:[#allocation7] sm:$0xf]
    %v230 = vld [vmem:[#allocation7 + $0x4] sm:$0xf]
    %v231 = vld [vmem:[#allocation7 + $0x8] sm:$0xf]
    %v232 = vld [vmem:[#allocation7 + $0xc] sm:$0xf]
    %v233 = vld [vmem:[#allocation7 + $0x10] sm:$0xf]
    %v234 = vld [vmem:[#allocation7 + $0x14] sm:$0xf]
    %v235 = vld [vmem:[#allocation7 + $0x18] sm:$0xf]
    %v236 = vld [vmem:[#allocation7 + $0x1c] sm:$0xf]
    %v237 = vld [vmem:[#allocation7 + $0x20] sm:$0xf]
    %v238 = vld [vmem:[#allocation7 + $0x24] sm:$0xf]
    %v239 = vld [vmem:[#allocation7 + $0x28] sm:$0xf]
    %v240 = vld [vmem:[#allocation7 + $0x2c] sm:$0xf]
    %v241 = vld [vmem:[#allocation7 + $0x30] sm:$0xf]
    %v242 = vld [vmem:[#allocation7 + $0x34] sm:$0xf]
    %v243 = vld [vmem:[#allocation7 + $0x38] sm:$0xf]
    %v244 = vld [vmem:[#allocation7 + $0x3c] sm:$0xf]
    %v245 = vld [vmem:[%s8] sm:$0x1]
    %v247 = vlaneseq
    %v248 = vshrl.u32 %v247, 7
    %v249 = vsub.s32 0, %v248
    %v250 = vrot.slane %v245, %v249
    %v268 = vunpack.c.l.b16 %v229
    %v269 = vunpack.c.l.b16 %v230
    %v270 = vunpack.c.l.b16 %v231
    %v271 = vunpack.c.l.b16 %v232
    %v272 = vunpack.c.l.b16 %v233
    %v273 = vunpack.c.l.b16 %v234
    %v274 = vunpack.c.l.b16 %v235
    %v275 = vunpack.c.l.b16 %v236
    %v276 = vunpack.c.l.b16 %v237
    %v277 = vunpack.c.l.b16 %v238
    %v278 = vunpack.c.l.b16 %v239
    %v279 = vunpack.c.l.b16 %v240
    %v280 = vunpack.c.l.b16 %v241
    %v281 = vunpack.c.l.b16 %v242
    %v282 = vunpack.c.l.b16 %v243
    %v283 = vunpack.c.l.b16 %v244
    %v284 = vpack.c.b16 %v269, %v268
    %v285 = vpack.c.b16 %v271, %v270
    %v286 = vpack.c.b16 %v273, %v272
    %v287 = vpack.c.b16 %v275, %v274
    %v288 = vpack.c.b16 %v277, %v276
    %v289 = vpack.c.b16 %v279, %v278
    %v290 = vpack.c.b16 %v281, %v280
    %v291 = vpack.c.b16 %v283, %v282
    %300 = vmatprep.subr.bf16.mxu0 0
    %301 = vmatpush1.bf16.msra.mxu0 %v284
    %302 = vmatprep.subr.bf16.mxu0 0
    %303 = vmatpush1.bf16.msra.mxu0 %v285
    %304 = vmatprep.subr.bf16.mxu0 0
    %305 = vmatpush1.bf16.msra.mxu0 %v286
    %306 = vmatprep.subr.bf16.mxu0 0
    %307 = vmatpush1.bf16.msra.mxu0 %v287
    %308 = vmatprep.subr.bf16.mxu0 0
    %309 = vmatpush1.bf16.msra.mxu0 %v288
    %310 = vmatprep.subr.bf16.mxu0 0
    %311 = vmatpush1.bf16.msra.mxu0 %v289
    %312 = vmatprep.subr.bf16.mxu0 0
    %313 = vmatpush1.bf16.msra.mxu0 %v290
    %314 = vmatprep.subr.bf16.mxu0 0
    %315 = vmatpush1.bf16.msra.mxu0 %v291
    %316 = vmatprep.subr.bf16.mxu0 0
    %317 = vmatpush1.bf16.msra.mxu0 0
    %318 = vmatprep.subr.bf16.mxu0 0
    %319 = vmatpush1.bf16.msra.mxu0 0
    %320 = vmatprep.subr.bf16.mxu0 0
    %321 = vmatpush1.bf16.msra.mxu0 0
    %322 = vmatprep.subr.bf16.mxu0 0
    %323 = vmatpush1.bf16.msra.mxu0 0
    %324 = vmatprep.subr.bf16.mxu0 0
    %325 = vmatpush1.bf16.msra.mxu0 0
    %326 = vmatprep.subr.bf16.mxu0 0
    %327 = vmatpush1.bf16.msra.mxu0 0
    %328 = vmatprep.subr.bf16.mxu0 0
    %329 = vmatpush1.bf16.msra.mxu0 0
    %330 = vmatprep.subr.bf16.mxu0 0
    %331 = vmatpush1.bf16.msra.mxu0 0
    %332 = vmatprep.mubr.bf16.mxu0 0
    %333 = vmatmul.mubr.bf16.gmra.mrb[0].mxu0 %v228
    %v334 = vpop.f32.mrb[0].mxu0
    %v335 = vadd.f32 %v250, %v334
    %v336 = vpop.f32.mrb[0].mxu0
    %v337 = vpop.f32.mrb[0].mxu0
    %v338 = vpop.f32.mrb[0].mxu0
    %339 = vdwg.mxu0
    %340 = vst [vmem:[#allocation8] sm:$0xff] %v335
    %vm341 = vcmp.lt.s32.totalorder %v202, 4
    %v342 = vsel %vm341, %v335, -1e+30
    %343 = vmax.xlane.f32.xlu0 %v342
    %v344 = vpop.xlane.xlu0 %343
    %v345 = vsub.f32 %v342, %v344
    %v346 = vmul.f32 %v345, 1.442695
    %v347 = vpow.pop %v346
    %348 = vadd.xlane.f32.xlu0 %v347
    %v349 = vpop.xlane.xlu0 %348
    %v350 = vlog2.pop %v349
    %v351 = vmul.f32 %v350, 0.6931472
    %v352 = vadd.f32 %v344, %v351
    %v353 = vld [vmem:[%s2] sm:$0xff]
    %354 = vset.pattern.permute.xlu0 0
    %355 = vperm.xlu0 %354, %v353
    %v356 = vpop.permute.xlu0 %355
    %vm357 = vcmp.eq.s32.totalorder %v202, %v356
    %v358 = vsel %vm357, 1, 0
    %v359 = vcvt.s32.f32 %v358
    %v360 = vmul.f32 %v359, %v335
    %361 = vadd.xlane.f32.xlu0 %v360
    %v362 = vpop.xlane.xlu0 %361
    %v363 = vsub.f32 %v352, %v362
    %vm364 = vcmask 7168
    %v365 = vsel %vm364, %v363, 0.0
    %366 = vadd.xlane.f32.xlu0 %v365
    %v367 = vpop.xlane.xlu0 %366
    %v368 = vrot.slane %v367, 4
    %v369 = vadd.f32 %v367, %v368
    %v370 = vrot.slane %v369, 2
    %v371 = vadd.f32 %v369, %v370
    %v372 = vrot.slane %v371, 1
    %v373 = vadd.f32 %v371, %v372
    %s374 = vtos %v373
    %v375 = vstv %s374
    %376 = vst [vmem:[#allocation9] sm:$0x1] %v375
    // Predicated region
    $region50: #{tpu_custom_call.1} parent=1 // pred_check
      _
    $region51: #{tpu_custom_call.1} parent=1 // pred_check_branch
      %378 = sbr.rel (0) target = $region53
    $region52: #{tpu_custom_call.1} parent=1 // pred_region
      %s380 = ssub.s32 128, 128
      %381 = vsyncadd [#allocation4], %s380
      %s383 = sshll.u32 [#allocation8], 4
      %s384 = int_to_ptr.vmem [resolvable:$true] %s383
      %386 = dma.vmem_to_hbm [thread:$0]  %s384, 128, %s9, [#allocation4]
    $region53: #{tpu_custom_call.1} parent=1 // pred_fallthru
      _
    // Predicated region
    $region54: #{tpu_custom_call.1} parent=1 // pred_check
      _
    $region55: #{tpu_custom_call.1} parent=1 // pred_check_branch
      %388 = sbr.rel (0) target = $region57
    $region56: #{tpu_custom_call.1} parent=1 // pred_region
      %s390 = ssub.s32 16, 16
      %391 = vsyncadd [#allocation10], %s390
      %s393 = sshll.u32 [#allocation9], 4
      %s394 = int_to_ptr.vmem [resolvable:$true] %s393
      %396 = dma.vmem_to_hbm [thread:$0]  %s394, 16, %s10, [#allocation10]
    $region57: #{tpu_custom_call.1} parent=1 // pred_fallthru
      _
    // Predicated region
    $region58: #{tpu_custom_call.1} parent=1 // pred_check
      _
    $region59: #{tpu_custom_call.1} parent=1 // pred_check_branch
      %398 = sbr.rel (0) target = $region61
    $region60: #{tpu_custom_call.1} parent=1 // pred_region
      %399 = dma.done [#allocation4], 128
    $region61: #{tpu_custom_call.1} parent=1 // pred_fallthru
      _
    // Predicated region
    $region62: #{tpu_custom_call.1} parent=1 // pred_check
      _
    $region63: #{tpu_custom_call.1} parent=1 // pred_check_branch
      %401 = sbr.rel (0) target = $region65
    $region64: #{tpu_custom_call.1} parent=1 // pred_region
      %402 = dma.done [#allocation10], 16
    $region65: #{tpu_custom_call.1} parent=1 // pred_fallthru
      _
    %403 = vsyncpa [#allocation3], 1
    %404 = vsyncpa [#allocation6], 1
    %405 = vsyncpa [#allocation4], 1
    %406 = vsyncpa [#allocation10], 1

// kernel: tpu_custom_call.1
$region0: #{tpu_custom_call.1}
  #allocation0 [shape = 'u32[]', space=smem, size = 0x4, offset = 0x4, fixed_abs, tag = 'smem constant byte address 0x4 - core index']
  #allocation1 [shape = 'u32[144,128]{1,0:T(1,128)}', space=vmem, size = 0x12000, scoped, tag = 'internal scratch']
  %s0 = inlined_call_operand.vmem [shape: f32[8,128], index: 0, kind: input, shape index: {}]
  %s1 = inlined_call_operand.hbm [shape: f32[8,128], index: 1, kind: input, shape index: {}]
  %s2 = inlined_call_operand.vmem [shape: s32[8,1], index: 2, kind: input, shape index: {}]
  %s3 = inlined_call_operand.hbm [shape: bf16[128,128], index: 3, kind: input, shape index: {}]
  %s4 = inlined_call_operand.vmem [shape: f32[1,128], index: 4, kind: input, shape index: {}]
  %s5 = inlined_call_operand.vmem [shape: f32[1,128], index: 5, kind: input, shape index: {}]
  %s6 = inlined_call_operand.vmem [shape: f32[1,128], index: 6, kind: input, shape index: {}]
  %s7 = inlined_call_operand.hbm [shape: bf16[128,128], index: 7, kind: input, shape index: {}]
  %s8 = inlined_call_operand.vmem [shape: f32[1,128], index: 8, kind: input, shape index: {}]
  %s9 = inlined_call_operand.hbm [shape: f32[8,128], index: 9, kind: output, shape index: {0}]
  %s10 = inlined_call_operand.hbm [shape: f32[1,128], index: 10, kind: output, shape index: {1}]
  %11 = xla_tuple %s9, %s10
  %s12 = sld [smem:[#allocation0]]
  $region66: #{tpu_custom_call.1} parent=0
    _
  %s14 = ssub.s32 1, %s12
  %s15 = scalar_select 0, %s14, %s12
  $region1: #{tpu_custom_call.1} parent=0
    #allocation2 [shape = 'u8[4096]{0}', space=vmem, size = 0x1000, scoped, tag = 'input window, operand 1, single buffered']
    #allocation3 [shape = 's32[1]{0}', space=sflag, size = 0x4, scoped, tag = 'scoped memory for tpu_custom_call.1']
    #allocation4 [shape = 's32[1]{0}', space=sflag, size = 0x4, scoped, tag = 'scoped memory for tpu_custom_call.1']
    #allocation5 [shape = 'u8[32768]{0}', space=vmem, size = 0x8000, scoped, tag = 'input window, operand 3, single buffered']
    #allocation6 [shape = 's32[1]{0}', space=sflag, size = 0x4, scoped, tag = 'scoped memory for tpu_custom_call.1']
    #allocation7 [shape = 'u8[32768]{0}', space=vmem, size = 0x8000, scoped, tag = 'input window, operand 7, single buffered']
    #allocation8 [shape = 'u8[4096]{0}', space=vmem, size = 0x1000, scoped, tag = 'output window, operand 0, single buffered']
    #allocation9 [shape = 'u8[512]{0}', space=vmem, size = 0x400, scoped, tag = 'output window, operand 1, single buffered']
    #allocation10 [shape = 's32[1]{0}', space=sflag, size = 0x4, scoped, tag = 'scoped memory for tpu_custom_call.1']
    %16 = vsyncpa [#allocation3], 0
    %17 = vsyncpa [#allocation6], 0
    %18 = vsyncpa [#allocation4], 0
    %19 = vsyncpa [#allocation10], 0
    // Predicated region
    $region2: #{tpu_custom_call.1} parent=1 // pred_check
      _
    $region3: #{tpu_custom_call.1} parent=1 // pred_check_branch
      %21 = sbr.rel (0) target = $region5
    $region4: #{tpu_custom_call.1} parent=1 // pred_region
      _
    $region5: #{tpu_custom_call.1} parent=1 // pred_fallthru
      _
    // Predicated region
    $region6: #{tpu_custom_call.1} parent=1 // pred_check
      _
    $region7: #{tpu_custom_call.1} parent=1 // pred_check_branch
      %23 = sbr.rel (0) target = $region9
    $region8: #{tpu_custom_call.1} parent=1 // pred_region
      %s25 = ssub.s32 128, 128
      %26 = vsyncadd [#allocation3], %s25
      %s28 = sshll.u32 [#allocation2], 4
      %s29 = int_to_ptr.vmem [resolvable:$true] %s28
      %31 = dma.hbm_to_vmem [thread:$0]  %s1, 128, %s29, [#allocation3]
    $region9: #{tpu_custom_call.1} parent=1 // pred_fallthru
      _
    // Predicated region
    $region10: #{tpu_custom_call.1} parent=1 // pred_check
      _
    $region11: #{tpu_custom_call.1} parent=1 // pred_check_branch
      %33 = sbr.rel (0) target = $region13
    $region12: #{tpu_custom_call.1} parent=1 // pred_region
      _
    $region13: #{tpu_custom_call.1} parent=1 // pred_fallthru
      _
    // Predicated region
    $region14: #{tpu_custom_call.1} parent=1 // pred_check
      _
    $region15: #{tpu_custom_call.1} parent=1 // pred_check_branch
      %35 = sbr.rel (0) target = $region17
    $region16: #{tpu_custom_call.1} parent=1 // pred_region
      %s37 = ssub.s32 1024, 1024
      %38 = vsyncadd [#allocation6], %s37
      %s39 = sshll.u32 [#allocation5], 4
      %s40 = int_to_ptr.vmem [resolvable:$true] %s39
      %45 = dma.hbm_to_vmem [thread:$0]  %s3, 1024, %s40, [#allocation6], 64, 64, 4
    $region17: #{tpu_custom_call.1} parent=1 // pred_fallthru
      _
    // Predicated region
    $region18: #{tpu_custom_call.1} parent=1 // pred_check
      _
    $region19: #{tpu_custom_call.1} parent=1 // pred_check_branch
      %47 = sbr.rel (0) target = $region21
    $region20: #{tpu_custom_call.1} parent=1 // pred_region
      _
    $region21: #{tpu_custom_call.1} parent=1 // pred_fallthru
      _
    // Predicated region
    $region22: #{tpu_custom_call.1} parent=1 // pred_check
      _
    $region23: #{tpu_custom_call.1} parent=1 // pred_check_branch
      %49 = sbr.rel (0) target = $region25
    $region24: #{tpu_custom_call.1} parent=1 // pred_region
      _
    $region25: #{tpu_custom_call.1} parent=1 // pred_fallthru
      _
    // Predicated region
    $region26: #{tpu_custom_call.1} parent=1 // pred_check
      _
    $region27: #{tpu_custom_call.1} parent=1 // pred_check_branch
      %51 = sbr.rel (0) target = $region29
    $region28: #{tpu_custom_call.1} parent=1 // pred_region
      _
    $region29: #{tpu_custom_call.1} parent=1 // pred_fallthru
      _
    // Predicated region
    $region30: #{tpu_custom_call.1} parent=1 // pred_check
      _
    $region31: #{tpu_custom_call.1} parent=1 // pred_check_branch
      %53 = sbr.rel (0) target = $region33
    $region32: #{tpu_custom_call.1} parent=1 // pred_region
      %s55 = ssub.s32 1024, 1024
      %56 = vsyncadd [#allocation6], %s55
      %s57 = sshll.u32 [#allocation7], 4
      %s58 = int_to_ptr.vmem [resolvable:$true] %s57
      %63 = dma.hbm_to_vmem [thread:$0]  %s7, 1024, %s58, [#allocation6], 64, 64, 4
    $region33: #{tpu_custom_call.1} parent=1 // pred_fallthru
      _
    // Predicated region
    $region34: #{tpu_custom_call.1} parent=1 // pred_check
      _
    $region35: #{tpu_custom_call.1} parent=1 // pred_check_branch
      %65 = sbr.rel (0) target = $region37
    $region36: #{tpu_custom_call.1} parent=1 // pred_region
      _
    $region37: #{tpu_custom_call.1} parent=1 // pred_fallthru
      _
    // Predicated region
    $region38: #{tpu_custom_call.1} parent=1 // pred_check
      _
    $region39: #{tpu_custom_call.1} parent=1 // pred_check_branch
      %67 = sbr.rel (0) target = $region41
    $region40: #{tpu_custom_call.1} parent=1 // pred_region
      %68 = dma.done [#allocation3], 128
    $region41: #{tpu_custom_call.1} parent=1 // pred_fallthru
      _
    // Predicated region
    $region42: #{tpu_custom_call.1} parent=1 // pred_check
      _
    $region43: #{tpu_custom_call.1} parent=1 // pred_check_branch
      %70 = sbr.rel (0) target = $region45
    $region44: #{tpu_custom_call.1} parent=1 // pred_region
      %71 = dma.done [#allocation6], 1024
    $region45: #{tpu_custom_call.1} parent=1 // pred_fallthru
      _
    // Predicated region
    $region46: #{tpu_custom_call.1} parent=1 // pred_check
      _
    $region47: #{tpu_custom_call.1} parent=1 // pred_check_branch
      %73 = sbr.rel (0) target = $region49
    $region48: #{tpu_custom_call.1} parent=1 // pred_region
      %74 = dma.done [#allocation6], 1024
    $region49: #{tpu_custom_call.1} parent=1 // pred_fallthru
      _
    %v76 = vld [vmem:[%s0] sm:$0xff]
    %v77 = vld [vmem:[#allocation2] sm:$0xff]
    %v78 = vsub.f32 %v76, %v77
    %v79 = vand.u32 2147483647, %v78
    %v80 = vpack.c.bf16 %v79, %v79
    %v81 = vld [vmem:[#allocation5] sm:$0xf]
    %v82 = vld [vmem:[#allocation5 + $0x4] sm:$0xf]
    %v83 = vld [vmem:[#allocation5 + $0x8] sm:$0xf]
    %v84 = vld [vmem:[#allocation5 + $0xc] sm:$0xf]
    %v85 = vld [vmem:[#allocation5 + $0x10] sm:$0xf]
    %v86 = vld [vmem:[#allocation5 + $0x14] sm:$0xf]
    %v87 = vld [vmem:[#allocation5 + $0x18] sm:$0xf]
    %v88 = vld [vmem:[#allocation5 + $0x1c] sm:$0xf]
    %v89 = vld [vmem:[#allocation5 + $0x20] sm:$0xf]
    %v90 = vld [vmem:[#allocation5 + $0x24] sm:$0xf]
    %v91 = vld [vmem:[#allocation5 + $0x28] sm:$0xf]
    %v92 = vld [vmem:[#allocation5 + $0x2c] sm:$0xf]
    %v93 = vld [vmem:[#allocation5 + $0x30] sm:$0xf]
    %v94 = vld [vmem:[#allocation5 + $0x34] sm:$0xf]
    %v95 = vld [vmem:[#allocation5 + $0x38] sm:$0xf]
    %v96 = vld [vmem:[#allocation5 + $0x3c] sm:$0xf]
    %v97 = vld [vmem:[%s4] sm:$0x1]
    %v99 = vlaneseq
    %v100 = vshrl.u32 %v99, 7
    %v101 = vsub.s32 0, %v100
    %v102 = vrot.slane %v97, %v101
    %v120 = vunpack.c.l.b16 %v81
    %v121 = vunpack.c.l.b16 %v82
    %v122 = vunpack.c.l.b16 %v83
    %v123 = vunpack.c.l.b16 %v84
    %v124 = vunpack.c.l.b16 %v85
    %v125 = vunpack.c.l.b16 %v86
    %v126 = vunpack.c.l.b16 %v87
    %v127 = vunpack.c.l.b16 %v88
    %v128 = vunpack.c.l.b16 %v89
    %v129 = vunpack.c.l.b16 %v90
    %v130 = vunpack.c.l.b16 %v91
    %v131 = vunpack.c.l.b16 %v92
    %v132 = vunpack.c.l.b16 %v93
    %v133 = vunpack.c.l.b16 %v94
    %v134 = vunpack.c.l.b16 %v95
    %v135 = vunpack.c.l.b16 %v96
    %v136 = vpack.c.b16 %v121, %v120
    %v137 = vpack.c.b16 %v123, %v122
    %v138 = vpack.c.b16 %v125, %v124
    %v139 = vpack.c.b16 %v127, %v126
    %v140 = vpack.c.b16 %v129, %v128
    %v141 = vpack.c.b16 %v131, %v130
    %v142 = vpack.c.b16 %v133, %v132
    %v143 = vpack.c.b16 %v135, %v134
    %152 = vmatprep.subr.bf16.mxu0 0
    %153 = vmatpush1.bf16.msra.mxu0 %v136
    %154 = vmatprep.subr.bf16.mxu0 0
    %155 = vmatpush1.bf16.msra.mxu0 %v137
    %156 = vmatprep.subr.bf16.mxu0 0
    %157 = vmatpush1.bf16.msra.mxu0 %v138
    %158 = vmatprep.subr.bf16.mxu0 0
    %159 = vmatpush1.bf16.msra.mxu0 %v139
    %160 = vmatprep.subr.bf16.mxu0 0
    %161 = vmatpush1.bf16.msra.mxu0 %v140
    %162 = vmatprep.subr.bf16.mxu0 0
    %163 = vmatpush1.bf16.msra.mxu0 %v141
    %164 = vmatprep.subr.bf16.mxu0 0
    %165 = vmatpush1.bf16.msra.mxu0 %v142
    %166 = vmatprep.subr.bf16.mxu0 0
    %167 = vmatpush1.bf16.msra.mxu0 %v143
    %168 = vmatprep.subr.bf16.mxu0 0
    %169 = vmatpush1.bf16.msra.mxu0 0
    %170 = vmatprep.subr.bf16.mxu0 0
    %171 = vmatpush1.bf16.msra.mxu0 0
    %172 = vmatprep.subr.bf16.mxu0 0
    %173 = vmatpush1.bf16.msra.mxu0 0
    %174 = vmatprep.subr.bf16.mxu0 0
    %175 = vmatpush1.bf16.msra.mxu0 0
    %176 = vmatprep.subr.bf16.mxu0 0
    %177 = vmatpush1.bf16.msra.mxu0 0
    %178 = vmatprep.subr.bf16.mxu0 0
    %179 = vmatpush1.bf16.msra.mxu0 0
    %180 = vmatprep.subr.bf16.mxu0 0
    %181 = vmatpush1.bf16.msra.mxu0 0
    %182 = vmatprep.subr.bf16.mxu0 0
    %183 = vmatpush1.bf16.msra.mxu0 0
    %184 = vmatprep.mubr.bf16.mxu0 0
    %185 = vmatmul.mubr.bf16.gmra.mrb[0].mxu0 %v80
    %v186 = vpop.f32.mrb[0].mxu0
    %v187 = vadd.f32 %v102, %v186
    %v188 = vpop.f32.mrb[0].mxu0
    %v189 = vpop.f32.mrb[0].mxu0
    %v190 = vpop.f32.mrb[0].mxu0
    %191 = vdwg.mxu0
    %v192 = vmul.f32 %v187, 0.5
    %v193 = vmul.f32 %v187, 0.70710677
    %v194 = verf.f32.pop %v193
    %v195 = vadd.f32 %v194, 1.0
    %v196 = vmul.f32 %v192, %v195
    %197 = vadd.xlane.f32.xlu0 %v196
    %v198 = vpop.xlane.xlu0 %197
    %v199 = vmul.f32 %v198, 0.03125
    %v200 = vsub.f32 %v196, %v199
    %v201 = vlaneseq
    %v202 = vand.u32 %v201, 127
    %vm203 = vcmp.lt.s32.totalorder %v202, 32
    %v204 = vsel %vm203, %v200, 0.0
    %v205 = vmul.f32 %v204, %v204
    %206 = vadd.xlane.f32.xlu0 %v205
    %v207 = vpop.xlane.xlu0 %206
    %v208 = vmul.f32 %v207, 0.03125
    %v209 = vadd.f32 %v208, 1e-05
    %v210 = vrsqrt.pop %v209
    %v211 = vmul.f32 %v204, %v210
    %v212 = vld [vmem:[%s5] sm:$0x1]
    %v214 = vlaneseq
    %v215 = vshrl.u32 %v214, 7
    %v216 = vsub.s32 0, %v215
    %v217 = vrot.slane %v212, %v216
    %v219 = vmul.f32 %v211, %v217
    %v220 = vld [vmem:[%s6] sm:$0x1]
    %v222 = vlaneseq
    %v223 = vshrl.u32 %v222, 7
    %v224 = vsub.s32 0, %v223
    %v225 = vrot.slane %v220, %v224
    %v227 = vadd.f32 %v219, %v225
    %v228 = vpack.c.bf16 %v227, %v227
    %v229 = vld [vmem:[#allocation7] sm:$0xf]
    %v230 = vld [vmem:[#allocation7 + $0x4] sm:$0xf]
    %v231 = vld [vmem:[#allocation7 + $0x8] sm:$0xf]
    %v232 = vld [vmem:[#allocation7 + $0xc] sm:$0xf]
    %v233 = vld [vmem:[#allocation7 + $0x10] sm:$0xf]
    %v234 = vld [vmem:[#allocation7 + $0x14] sm:$0xf]
    %v235 = vld [vmem:[#allocation7 + $0x18] sm:$0xf]
    %v236 = vld [vmem:[#allocation7 + $0x1c] sm:$0xf]
    %v237 = vld [vmem:[#allocation7 + $0x20] sm:$0xf]
    %v238 = vld [vmem:[#allocation7 + $0x24] sm:$0xf]
    %v239 = vld [vmem:[#allocation7 + $0x28] sm:$0xf]
    %v240 = vld [vmem:[#allocation7 + $0x2c] sm:$0xf]
    %v241 = vld [vmem:[#allocation7 + $0x30] sm:$0xf]
    %v242 = vld [vmem:[#allocation7 + $0x34] sm:$0xf]
    %v243 = vld [vmem:[#allocation7 + $0x38] sm:$0xf]
    %v244 = vld [vmem:[#allocation7 + $0x3c] sm:$0xf]
    %v245 = vld [vmem:[%s8] sm:$0x1]
    %v247 = vlaneseq
    %v248 = vshrl.u32 %v247, 7
    %v249 = vsub.s32 0, %v248
    %v250 = vrot.slane %v245, %v249
    %v268 = vunpack.c.l.b16 %v229
    %v269 = vunpack.c.l.b16 %v230
    %v270 = vunpack.c.l.b16 %v231
    %v271 = vunpack.c.l.b16 %v232
    %v272 = vunpack.c.l.b16 %v233
    %v273 = vunpack.c.l.b16 %v234
    %v274 = vunpack.c.l.b16 %v235
    %v275 = vunpack.c.l.b16 %v236
    %v276 = vunpack.c.l.b16 %v237
    %v277 = vunpack.c.l.b16 %v238
    %v278 = vunpack.c.l.b16 %v239
    %v279 = vunpack.c.l.b16 %v240
    %v280 = vunpack.c.l.b16 %v241
    %v281 = vunpack.c.l.b16 %v242
    %v282 = vunpack.c.l.b16 %v243
    %v283 = vunpack.c.l.b16 %v244
    %v284 = vpack.c.b16 %v269, %v268
    %v285 = vpack.c.b16 %v271, %v270
    %v286 = vpack.c.b16 %v273, %v272
    %v287 = vpack.c.b16 %v275, %v274
    %v288 = vpack.c.b16 %v277, %v276
    %v289 = vpack.c.b16 %v279, %v278
    %v290 = vpack.c.b16 %v281, %v280
    %v291 = vpack.c.b16 %v283, %v282
    %300 = vmatprep.subr.bf16.mxu0 0
    %301 = vmatpush1.bf16.msra.mxu0 %v284
    %302 = vmatprep.subr.bf16.mxu0 0
    %303 = vmatpush1.bf16.msra.mxu0 %v285
    %304 = vmatprep.subr.bf16.mxu0 0
    %305 = vmatpush1.bf16.msra.mxu0 %v286
    %306 = vmatprep.subr.bf16.mxu0 0
    %307 = vmatpush1.bf16.msra.mxu0 %v287
    %308 = vmatprep.subr.bf16.mxu0 0
    %309 = vmatpush1.bf16.msra.mxu0 %v288
    %310 = vmatprep.subr.bf16.mxu0 0
    %311 = vmatpush1.bf16.msra.mxu0 %v289
    %312 = vmatprep.subr.bf16.mxu0 0
    %313 = vmatpush1.bf16.msra.mxu0 %v290
    %314 = vmatprep.subr.bf16.mxu0 0
    %315 = vmatpush1.bf16.msra.mxu0 %v291
    %316 = vmatprep.subr.bf16.mxu0 0
    %317 = vmatpush1.bf16.msra.mxu0 0
    %318 = vmatprep.subr.bf16.mxu0 0
    %319 = vmatpush1.bf16.msra.mxu0 0
    %320 = vmatprep.subr.bf16.mxu0 0
    %321 = vmatpush1.bf16.msra.mxu0 0
    %322 = vmatprep.subr.bf16.mxu0 0
    %323 = vmatpush1.bf16.msra.mxu0 0
    %324 = vmatprep.subr.bf16.mxu0 0
    %325 = vmatpush1.bf16.msra.mxu0 0
    %326 = vmatprep.subr.bf16.mxu0 0
    %327 = vmatpush1.bf16.msra.mxu0 0
    %328 = vmatprep.subr.bf16.mxu0 0
    %329 = vmatpush1.bf16.msra.mxu0 0
    %330 = vmatprep.subr.bf16.mxu0 0
    %331 = vmatpush1.bf16.msra.mxu0 0
    %332 = vmatprep.mubr.bf16.mxu0 0
    %333 = vmatmul.mubr.bf16.gmra.mrb[0].mxu0 %v228
    %v334 = vpop.f32.mrb[0].mxu0
    %v335 = vadd.f32 %v250, %v334
    %v336 = vpop.f32.mrb[0].mxu0
    %v337 = vpop.f32.mrb[0].mxu0
    %v338 = vpop.f32.mrb[0].mxu0
    %339 = vdwg.mxu0
    %340 = vst [vmem:[#allocation8] sm:$0xff] %v335
    %vm341 = vcmp.lt.s32.totalorder %v202, 4
    %v342 = vsel %vm341, %v335, -1e+30
    %343 = vmax.xlane.f32.xlu0 %v342
    %v344 = vpop.xlane.xlu0 %343
    %v345 = vsub.f32 %v342, %v344
    %v346 = vmul.f32 %v345, 1.442695
    %v347 = vpow.pop %v346
    %348 = vadd.xlane.f32.xlu0 %v347
    %v349 = vpop.xlane.xlu0 %348
    %v350 = vlog2.pop %v349
    %v351 = vmul.f32 %v350, 0.6931472
    %v352 = vadd.f32 %v344, %v351
    %v353 = vld [vmem:[%s2] sm:$0xff]
    %354 = vset.pattern.permute.xlu0 0
    %355 = vperm.xlu0 %354, %v353
    %v356 = vpop.permute.xlu0 %355
    %vm357 = vcmp.eq.s32.totalorder %v202, %v356
    %v358 = vsel %vm357, 1, 0
    %v359 = vcvt.s32.f32 %v358
    %v360 = vmul.f32 %v359, %v335
    %361 = vadd.xlane.f32.xlu0 %v360
    %v362 = vpop.xlane.xlu0 %361
    %v363 = vsub.f32 %v352, %v362
    %vm364 = vcmask 7168
    %v365 = vsel %vm364, %v363, 0.0
    %366 = vadd.xlane.f32.xlu0 %v365
    %v367 = vpop.xlane.xlu0 %366
    %v368 = vrot.slane %v367, 4
    %v369 = vadd.f32 %v367, %v368
    %v370 = vrot.slane %v369, 2
    %v371 = vadd.f32 %v369, %v370
    %v372 = vrot.slane %v371, 1
    %v373 = vadd.f32 %v371, %v372
    %s374 = vtos %v373
    %v375 = vstv %s374
    %376 = vst [vmem:[#allocation9] sm:$0x1] %v375
    // Predicated region
    $region50: #{tpu_custom_call.1} parent=1 // pred_check
      _
    $region51: #{tpu_custom_call.1} parent=1 // pred_check_branch
      %378 = sbr.rel (0) target = $region53
    $region52: #{tpu_custom_call.1} parent=1 // pred_region
      %s380 = ssub.s32 128, 128
      %381 = vsyncadd [#allocation4], %s380
      %s383 = sshll.u32 [#allocation8], 4
      %s384 = int_to_ptr.vmem [resolvable:$true] %s383
      %386 = dma.vmem_to_hbm [thread:$0]  %s384, 128, %s9, [#allocation4]
    $region53: #{tpu_custom_call.1} parent=1 // pred_fallthru
      _
    // Predicated region
    $region54: #{tpu_custom_call.1} parent=1 // pred_check
      _
    $region55: #{tpu_custom_call.1} parent=1 // pred_check_branch
      %388 = sbr.rel (0) target = $region57
    $region56: #{tpu_custom_call.1} parent=1 // pred_region
      %s390 = ssub.s32 16, 16
      %391 = vsyncadd [#allocation10], %s390
      %s393 = sshll.u32 [#allocation9], 4
      %s394 = int_to_ptr.vmem [resolvable:$true] %s393
      %396 = dma.vmem_to_hbm [thread:$0]  %s394, 16, %s10, [#allocation10]
    $region57: #{tpu_custom_call.1} parent=1 // pred_fallthru
      _
    // Predicated region
    $region58: #{tpu_custom_call.1} parent=1 // pred_check
      _
    $region59: #{tpu_custom_call.1} parent=1 // pred_check_branch
      %398 = sbr.rel (0) target = $region61
    $region60: #{tpu_custom_call.1} parent=1 // pred_region
      %399 = dma.done [#allocation4], 128
    $region61: #{tpu_custom_call.1} parent=1 // pred_fallthru
      _
    // Predicated region
    $region62: #{tpu_custom_call.1} parent=1 // pred_check
      _
    $region63: #{tpu_custom_call.1} parent=1 // pred_check_branch
      %401 = sbr.rel (0) target = $region65
    $region64: #{tpu_custom_call.1} parent=1 // pred_region
      %402 = dma.done [#allocation10], 16
    $region65: #{tpu_custom_call.1} parent=1 // pred_fallthru
      _
    %403 = vsyncpa [#allocation3], 1
    %404 = vsyncpa [#allocation6], 1
    %405 = vsyncpa [#allocation4], 1
    %406 = vsyncpa [#allocation10], 1

</llo_original>
